<compile_context>
chip_gen: v6e
topology: v6e:2x2x1
jax: 0.10.0
libtpu: 0.0.40
codegen_flags: <defaults>
</compile_context>

<pallas_src>
import functools
import math

import jax
import jax.numpy as jnp
from jax.experimental import pallas as pl
from jax.experimental.pallas import tpu as pltpu


def _round_up(x: int, m: int) -> int:
    return (x + m - 1) // m * m


def _apply_act(h, name):
    if name == "relu":
        return jnp.maximum(h, 0.0)
    if name == "elu":                       # nn.ELU default alpha = 1.0
        return jnp.where(h > 0.0, h, jnp.exp(h) - 1.0)
    return h                                # 'none' / None


def _fused_mlp_kernel(*refs, num_layers: int, activation):
    """Fused MLP: chain of (matmul + folded-bias/BN shift [+ activation]).

    refs = (x_ref, w0, s0, w1, s1, ..., w_{L-1}, s_{L-1}, o_ref)
    Intermediate activations stay on-chip; only the x tile comes in and the
    output tile goes out.
    """
    x_ref = refs[0]
    o_ref = refs[-1]
    h = x_ref[...].astype(jnp.float32)
    for l in range(num_layers):
        w = refs[1 + 2 * l][...]            # (K_l, N_l), VMEM-resident
        s = refs[2 + 2 * l][...]            # (1,  N_l), VMEM-resident
        h = jnp.dot(h, w, preferred_element_type=jnp.float32) + s
        if l != num_layers - 1:             # MyMLP: no activation on last layer
            h = _apply_act(h, activation)
    o_ref[...] = h.astype(o_ref.dtype)


def fused_mlp(x, folded_params, *, activation="relu", tm: int = 1024):
    """Run the whole MLP in one pallas_call.

    x: (..., K0) float32.
    folded_params: list of (w_folded (K_l, N_l), shift_folded (1, N_l)).
    Returns (..., N_last).
    """
    orig_lead = x.shape[:-1]
    k0 = x.shape[-1]
    x2 = x.reshape(-1, k0)
    m = x2.shape[0]

    num_layers = len(folded_params)
    n_out = folded_params[-1][0].shape[1]

    # Batch tile: multiple of 8 sublanes, capped so tiny batches run one step.
    tm_eff = min(_round_up(tm, 8), _round_up(m, 8))

    # Keep (double-buffered x + out tiles + resident params + f32 temps)
    # comfortably under the default scoped-VMEM limit.
    widest = max([k0] + [w.shape[1] for (w, _) in folded_params])
    param_bytes = sum(w.size * 4 + s.size * 4 for (w, s) in folded_params)
    budget = 24 * 1024 * 1024
    while tm_eff > 8 and (tm_eff * (2 * k0 + 2 * n_out + 2 * widest) * 4
                          + param_bytes) > budget:
        tm_eff = _round_up(tm_eff // 2, 8)

    m_pad = _round_up(m, tm_eff)
    if m_pad != m:
        x2 = jnp.pad(x2, ((0, m_pad - m), (0, 0)))  # pad rows, sliced off below

    in_specs = [pl.BlockSpec((tm_eff, k0), lambda i: (i, 0))]
    flat_args = [x2]
    for (w, s) in folded_params:
        kl, nl = w.shape
        # Constant index maps -> weights/shifts DMA'd once, VMEM-resident.
        in_specs.append(pl.BlockSpec((kl, nl), lambda i: (0, 0)))
        in_specs.append(pl.BlockSpec((1, nl), lambda i: (0, 0)))
        flat_args.extend([w, s])

    kernel = functools.partial(
        _fused_mlp_kernel, num_layers=num_layers, activation=activation)

    out = pl.pallas_call(
        kernel,
        out_shape=jax.ShapeDtypeStruct((m_pad, n_out), x.dtype),
        grid_spec=pltpu.PrefetchScalarGridSpec(
            num_scalar_prefetch=0,
            grid=(m_pad // tm_eff,),
            in_specs=in_specs,
            out_specs=pl.BlockSpec((tm_eff, n_out), lambda i: (i, 0)),
        ),
        compiler_params=pltpu.CompilerParams(
            dimension_semantics=("parallel",)),
    )(*flat_args)

    if m_pad != m:
        out = out[:m]
    return out.reshape(orig_lead + (n_out,))


def init_raw_params(key, unit_list):
    """nn.Linear + BatchNorm1d(eval) defaults: (w, b, gamma, beta, mean, var)."""
    params = []
    for i in range(len(unit_list) - 1):
        fan_in, fan_out = unit_list[i], unit_list[i + 1]
        key, kw, kb = jax.random.split(key, 3)
        bound = 1.0 / math.sqrt(fan_in)
        w = jax.random.uniform(kw, (fan_in, fan_out), jnp.float32, -bound, bound)
        b = jax.random.uniform(kb, (1, fan_out), jnp.float32, -bound, bound)
        gamma = jnp.ones((1, fan_out), jnp.float32)
        beta = jnp.zeros((1, fan_out), jnp.float32)
        running_mean = jnp.zeros((1, fan_out), jnp.float32)
        running_var = jnp.ones((1, fan_out), jnp.float32)
        params.append((w, b, gamma, beta, running_mean, running_var))
    return params


def fold_params(raw_params, eps: float = 1e-5):
    """Fold bias + eval-mode BN into each weight: y = x @ w' + shift'."""
    folded = []
    for (w, b, gamma, beta, mean, var) in raw_params:
        scale = gamma / jnp.sqrt(var + eps)          # (1, N)
        w_f = w * scale                              # (K, N) * (1, N)
        shift_f = (b - mean) * scale + beta          # (1, N)
        folded.append((w_f, shift_f))
    return folded


if __name__ == "__main__":
    key = jax.random.PRNGKey(0)
    unit_list = (32, 64, 48, 16)   # MyMLP((32, 64, 48, 16), activation='relu')
    batch = 8

    kx, kp = jax.random.split(key)
    x = jax.random.normal(kx, (batch, unit_list[0]), jnp.float32)

    raw_params = init_raw_params(kp, unit_list)
    folded_params = fold_params(raw_params)

    out = fused_mlp(x, folded_params, activation="relu")
    out = jax.block_until_ready(out)

    # pure-JAX reference using the UNfolded Linear -> BN(eval) -> ReLU math.
    eps = 1e-5
    ref = x
    for i, (w, b, gamma, beta, mean, var) in enumerate(raw_params):
        z = ref @ w + b
        z = (z - mean) / jnp.sqrt(var + eps) * gamma + beta
        if i != len(raw_params) - 1:
            z = jnp.maximum(z, 0.0)
        ref = z

    assert out.shape == (batch, unit_list[-1])
    assert jnp.allclose(out, ref, atol=1e-5, rtol=1e-5), (
        float(jnp.max(jnp.abs(out - ref))))

    print("KERNEL_OK")
</pallas_src>

<mosaic_0001>
module attributes {stable_mosaic.version = 11 : i64} {
  func.func @_fused_mlp_kernel(%arg0: i32, %arg1: memref<8x32xf32, #tpu.memory_space<vmem>>, %arg2: memref<32x64xf32, #tpu.memory_space<vmem>>, %arg3: memref<1x64xf32, #tpu.memory_space<vmem>>, %arg4: memref<64x48xf32, #tpu.memory_space<vmem>>, %arg5: memref<1x48xf32, #tpu.memory_space<vmem>>, %arg6: memref<48x16xf32, #tpu.memory_space<vmem>>, %arg7: memref<1x16xf32, #tpu.memory_space<vmem>>, %arg8: memref<8x16xf32, #tpu.memory_space<vmem>>) attributes {dimension_semantics = [#tpu.dimension_semantics<parallel>], iteration_bounds = array<i64: 1>, scalar_prefetch = 0 : i64, scratch_operands = 0 : i64, tpu.core_type = #tpu.core_type<tc>, window_params = [{transform_indices = @transform_0, window_bounds = array<i64: 8, 32>}, {pipeline_mode = #tpu.pipeline_mode<synchronous>, transform_indices = @transform_1, window_bounds = array<i64: 32, 64>}, {pipeline_mode = #tpu.pipeline_mode<synchronous>, transform_indices = @transform_2, window_bounds = array<i64: 1, 64>}, {pipeline_mode = #tpu.pipeline_mode<synchronous>, transform_indices = @transform_3, window_bounds = array<i64: 64, 48>}, {pipeline_mode = #tpu.pipeline_mode<synchronous>, transform_indices = @transform_4, window_bounds = array<i64: 1, 48>}, {pipeline_mode = #tpu.pipeline_mode<synchronous>, transform_indices = @transform_5, window_bounds = array<i64: 48, 16>}, {pipeline_mode = #tpu.pipeline_mode<synchronous>, transform_indices = @transform_6, window_bounds = array<i64: 1, 16>}, {transform_indices = @transform_7, window_bounds = array<i64: 8, 16>}]} {
    %c0 = arith.constant 0 : index
    %c0_0 = arith.constant 0 : index
    %0 = vector.load %arg1[%c0, %c0_0] : memref<8x32xf32, #tpu.memory_space<vmem>>, vector<8x32xf32>
    %c0_1 = arith.constant 0 : index
    %c0_2 = arith.constant 0 : index
    %1 = vector.load %arg2[%c0_1, %c0_2] : memref<32x64xf32, #tpu.memory_space<vmem>>, vector<32x64xf32>
    %c0_3 = arith.constant 0 : index
    %c0_4 = arith.constant 0 : index
    %2 = vector.load %arg3[%c0_3, %c0_4] : memref<1x64xf32, #tpu.memory_space<vmem>>, vector<1x64xf32>
    %cst = arith.constant dense<0.000000e+00> : vector<8x64xf32>
    %3 = tpu.matmul %0, %1, %cst {dimension_numbers = #tpu.dot_dimension_numbers<[1], [0], [0], [1], [0, 0, 1, 1], [], []>} : vector<8x32xf32>, vector<32x64xf32>, vector<8x64xf32> -> vector<8x64xf32>
    %4 = vector.broadcast %2 : vector<1x64xf32> to vector<8x64xf32>
    %5 = arith.addf %3, %4 : vector<8x64xf32>
    %cst_5 = arith.constant 0.000000e+00 : f32
    %6 = vector.broadcast %cst_5 : f32 to vector<8x64xf32>
    %7 = arith.maximumf %5, %6 : vector<8x64xf32>
    %c0_6 = arith.constant 0 : index
    %c0_7 = arith.constant 0 : index
    %8 = vector.load %arg4[%c0_6, %c0_7] : memref<64x48xf32, #tpu.memory_space<vmem>>, vector<64x48xf32>
    %c0_8 = arith.constant 0 : index
    %c0_9 = arith.constant 0 : index
    %9 = vector.load %arg5[%c0_8, %c0_9] : memref<1x48xf32, #tpu.memory_space<vmem>>, vector<1x48xf32>
    %cst_10 = arith.constant dense<0.000000e+00> : vector<8x48xf32>
    %10 = tpu.matmul %7, %8, %cst_10 {dimension_numbers = #tpu.dot_dimension_numbers<[1], [0], [0], [1], [0, 0, 1, 1], [], []>} : vector<8x64xf32>, vector<64x48xf32>, vector<8x48xf32> -> vector<8x48xf32>
    %11 = vector.broadcast %9 : vector<1x48xf32> to vector<8x48xf32>
    %12 = arith.addf %10, %11 : vector<8x48xf32>
    %cst_11 = arith.constant 0.000000e+00 : f32
    %13 = vector.broadcast %cst_11 : f32 to vector<8x48xf32>
    %14 = arith.maximumf %12, %13 : vector<8x48xf32>
    %c0_12 = arith.constant 0 : index
    %c0_13 = arith.constant 0 : index
    %15 = vector.load %arg6[%c0_12, %c0_13] : memref<48x16xf32, #tpu.memory_space<vmem>>, vector<48x16xf32>
    %c0_14 = arith.constant 0 : index
    %c0_15 = arith.constant 0 : index
    %16 = vector.load %arg7[%c0_14, %c0_15] : memref<1x16xf32, #tpu.memory_space<vmem>>, vector<1x16xf32>
    %cst_16 = arith.constant dense<0.000000e+00> : vector<8x16xf32>
    %17 = tpu.matmul %14, %15, %cst_16 {dimension_numbers = #tpu.dot_dimension_numbers<[1], [0], [0], [1], [0, 0, 1, 1], [], []>} : vector<8x48xf32>, vector<48x16xf32>, vector<8x16xf32> -> vector<8x16xf32>
    %18 = vector.broadcast %16 : vector<1x16xf32> to vector<8x16xf32>
    %19 = arith.addf %17, %18 : vector<8x16xf32>
    %c0_17 = arith.constant 0 : index
    %c0_18 = arith.constant 0 : index
    %20 = vector.load %arg8[%c0_17, %c0_18] : memref<8x16xf32, #tpu.memory_space<vmem>>, vector<8x16xf32>
    tpu.vector_store %arg8[%c0_17, %c0_18], %19 {strides = array<i32>} : memref<8x16xf32, #tpu.memory_space<vmem>>, vector<8x16xf32>,
    return
  }
  func.func @transform_0(%arg0: i32) -> (i32, i32) {
    %c0_i32 = arith.constant 0 : i32
    %c0_i32_0 = arith.constant 0 : i32
    return %arg0, %c0_i32 : i32, i32
  }
  func.func @transform_1(%arg0: i32) -> (i32, i32) {
    %c0_i32 = arith.constant 0 : i32
    %c0_i32_0 = arith.constant 0 : i32
    %c0_i32_1 = arith.constant 0 : i32
    return %c0_i32, %c0_i32_0 : i32, i32
  }
  func.func @transform_2(%arg0: i32) -> (i32, i32) {
    %c0_i32 = arith.constant 0 : i32
    %c0_i32_0 = arith.constant 0 : i32
    %c0_i32_1 = arith.constant 0 : i32
    return %c0_i32, %c0_i32_0 : i32, i32
  }
  func.func @transform_3(%arg0: i32) -> (i32, i32) {
    %c0_i32 = arith.constant 0 : i32
    %c0_i32_0 = arith.constant 0 : i32
    %c0_i32_1 = arith.constant 0 : i32
    return %c0_i32, %c0_i32_0 : i32, i32
  }
  func.func @transform_4(%arg0: i32) -> (i32, i32) {
    %c0_i32 = arith.constant 0 : i32
    %c0_i32_0 = arith.constant 0 : i32
    %c0_i32_1 = arith.constant 0 : i32
    return %c0_i32, %c0_i32_0 : i32, i32
  }
  func.func @transform_5(%arg0: i32) -> (i32, i32) {
    %c0_i32 = arith.constant 0 : i32
    %c0_i32_0 = arith.constant 0 : i32
    %c0_i32_1 = arith.constant 0 : i32
    return %c0_i32, %c0_i32_0 : i32, i32
  }
  func.func @transform_6(%arg0: i32) -> (i32, i32) {
    %c0_i32 = arith.constant 0 : i32
    %c0_i32_0 = arith.constant 0 : i32
    %c0_i32_1 = arith.constant 0 : i32
    return %c0_i32, %c0_i32_0 : i32, i32
  }
  func.func @transform_7(%arg0: i32) -> (i32, i32) {
    %c0_i32 = arith.constant 0 : i32
    %c0_i32_0 = arith.constant 0 : i32
    return %arg0, %c0_i32 : i32, i32
  }
}

</mosaic_0001>

<llo_original>
// kernel: tpu_custom_call.1
$region0: #{tpu_custom_call.1}
  #allocation0 [shape = 'u32[]', space=smem, size = 0x4, offset = 0x4, fixed_abs, tag = 'smem constant byte address 0x4 - core index']
  #allocation1 [shape = 'u32[144,128]{1,0:T(1,128)}', space=vmem, size = 0x12000, scoped, tag = 'internal scratch']
  %s0 = inlined_call_operand.vmem [shape: f32[8,32], index: 0, kind: input, shape index: {}]
  %s1 = inlined_call_operand.vmem [shape: f32[32,64], index: 1, kind: input, shape index: {}]
  %s2 = inlined_call_operand.vmem [shape: f32[1,64], index: 2, kind: input, shape index: {}]
  %s3 = inlined_call_operand.vmem [shape: f32[64,48], index: 3, kind: input, shape index: {}]
  %s4 = inlined_call_operand.vmem [shape: f32[1,48], index: 4, kind: input, shape index: {}]
  %s5 = inlined_call_operand.vmem [shape: f32[48,16], index: 5, kind: input, shape index: {}]
  %s6 = inlined_call_operand.vmem [shape: f32[1,16], index: 6, kind: input, shape index: {}]
  %s7 = inlined_call_operand.hbm [shape: f32[8,16], index: 7, kind: output, shape index: {}]
  %s8 = sld [smem:[#allocation0]]
  $region38: #{tpu_custom_call.1} parent=0
    _
  %s10 = ssub.s32 1, %s8
  %s11 = scalar_select 0, %s10, %s8
  $region1: #{tpu_custom_call.1} parent=0
    #allocation2 [shape = 'u8[4096]{0}', space=vmem, size = 0x1000, scoped, tag = 'output window, operand 0, single buffered']
    #allocation3 [shape = 's32[1]{0}', space=sflag, size = 0x4, scoped, tag = 'scoped memory for tpu_custom_call.1']
    %12 = vsyncpa [#allocation3], 0
    // Predicated region
    $region2: #{tpu_custom_call.1} parent=1 // pred_check
      _
    $region3: #{tpu_custom_call.1} parent=1 // pred_check_branch
      %14 = sbr.rel (0) target = $region5
    $region4: #{tpu_custom_call.1} parent=1 // pred_region
      _
    $region5: #{tpu_custom_call.1} parent=1 // pred_fallthru
      _
    // Predicated region
    $region6: #{tpu_custom_call.1} parent=1 // pred_check
      _
    $region7: #{tpu_custom_call.1} parent=1 // pred_check_branch
      %16 = sbr.rel (0) target = $region9
    $region8: #{tpu_custom_call.1} parent=1 // pred_region
      _
    $region9: #{tpu_custom_call.1} parent=1 // pred_fallthru
      _
    // Predicated region
    $region10: #{tpu_custom_call.1} parent=1 // pred_check
      _
    $region11: #{tpu_custom_call.1} parent=1 // pred_check_branch
      %18 = sbr.rel (0) target = $region13
    $region12: #{tpu_custom_call.1} parent=1 // pred_region
      _
    $region13: #{tpu_custom_call.1} parent=1 // pred_fallthru
      _
    // Predicated region
    $region14: #{tpu_custom_call.1} parent=1 // pred_check
      _
    $region15: #{tpu_custom_call.1} parent=1 // pred_check_branch
      %20 = sbr.rel (0) target = $region17
    $region16: #{tpu_custom_call.1} parent=1 // pred_region
      _
    $region17: #{tpu_custom_call.1} parent=1 // pred_fallthru
      _
    // Predicated region
    $region18: #{tpu_custom_call.1} parent=1 // pred_check
      _
    $region19: #{tpu_custom_call.1} parent=1 // pred_check_branch
      %22 = sbr.rel (0) target = $region21
    $region20: #{tpu_custom_call.1} parent=1 // pred_region
      _
    $region21: #{tpu_custom_call.1} parent=1 // pred_fallthru
      _
    // Predicated region
    $region22: #{tpu_custom_call.1} parent=1 // pred_check
      _
    $region23: #{tpu_custom_call.1} parent=1 // pred_check_branch
      %24 = sbr.rel (0) target = $region25
    $region24: #{tpu_custom_call.1} parent=1 // pred_region
      _
    $region25: #{tpu_custom_call.1} parent=1 // pred_fallthru
      _
    // Predicated region
    $region26: #{tpu_custom_call.1} parent=1 // pred_check
      _
    $region27: #{tpu_custom_call.1} parent=1 // pred_check_branch
      %26 = sbr.rel (0) target = $region29
    $region28: #{tpu_custom_call.1} parent=1 // pred_region
      _
    $region29: #{tpu_custom_call.1} parent=1 // pred_fallthru
      _
    %v27 = vld [vmem:[%s0] sm:$0xff]
    %v28 = vld [vmem:[%s1] sm:$0xff]
    %v29 = vld [vmem:[%s1 + $0x8] sm:$0xff]
    %v30 = vld [vmem:[%s1 + $0x10] sm:$0xff]
    %v31 = vld [vmem:[%s1 + $0x18] sm:$0xff]
    %v32 = vld [vmem:[%s2] sm:$0x1]
    %v34 = vlaneseq
    %v35 = vshrl.u32 %v34, 7
    %v36 = vsub.s32 0, %v35
    %v37 = vrot.slane %v32, %v36
    %vm39 = vcmask 261120
    %v41 = vsel %vm39, %v27, 0
    %43 = vmatprep.subr.mxu0 0.0
    %44 = vmatpush1.msra.mxu0 0.0
    %45 = vmatprep.subr.mxu0 0.0
    %46 = vmatpush1.msra.mxu0 0.0
    %47 = vmatprep.subr.mxu0 0.0
    %48 = vmatpush1.msra.mxu0 0.0
    %49 = vmatprep.subr.mxu0 0.0
    %50 = vmatpush1.msra.mxu0 0.0
    %51 = vmatprep.subr.mxu0 0.0
    %52 = vmatpush1.msra.mxu0 0.0
    %53 = vmatprep.subr.mxu0 0.0
    %54 = vmatpush1.msra.mxu0 0.0
    %55 = vmatprep.subr.mxu0 0.0
    %56 = vmatpush1.msra.mxu0 0.0
    %57 = vmatprep.subr.mxu0 0.0
    %58 = vmatpush1.msra.mxu0 0.0
    %59 = vmatprep.subr.mxu0 0.0
    %60 = vmatpush1.msra.mxu0 0.0
    %61 = vmatprep.subr.mxu0 0.0
    %62 = vmatpush1.msra.mxu0 0.0
    %63 = vmatprep.subr.mxu0 0.0
    %64 = vmatpush1.msra.mxu0 0.0
    %65 = vmatprep.subr.mxu0 0.0
    %66 = vmatpush1.msra.mxu0 0.0
    %67 = vmatprep.subr.mxu0 0.0
    %68 = vmatpush1.msra.mxu0 %v31
    %69 = vmatprep.subr.mxu0 0.0
    %70 = vmatpush1.msra.mxu0 %v30
    %71 = vmatprep.subr.mxu0 0.0
    %72 = vmatpush1.msra.mxu0 %v29
    %73 = vmatprep.subr.mxu0 0.0
    %74 = vmatpush1.msra.mxu0 %v28
    %75 = vmatprep.subr.mxu0 0.0
    %76 = vmatpush2.msra.mxu0 0.0
    %77 = vmatprep.subr.mxu0 0.0
    %78 = vmatpush2.msra.mxu0 0.0
    %79 = vmatprep.subr.mxu0 0.0
    %80 = vmatpush2.msra.mxu0 0.0
    %81 = vmatprep.subr.mxu0 0.0
    %82 = vmatpush2.msra.mxu0 0.0
    %83 = vmatprep.subr.mxu0 0.0
    %84 = vmatpush2.msra.mxu0 0.0
    %85 = vmatprep.subr.mxu0 0.0
    %86 = vmatpush2.msra.mxu0 0.0
    %87 = vmatprep.subr.mxu0 0.0
    %88 = vmatpush2.msra.mxu0 0.0
    %89 = vmatprep.subr.mxu0 0.0
    %90 = vmatpush2.msra.mxu0 0.0
    %91 = vmatprep.subr.mxu0 0.0
    %92 = vmatpush2.msra.mxu0 0.0
    %93 = vmatprep.subr.mxu0 0.0
    %94 = vmatpush2.msra.mxu0 0.0
    %95 = vmatprep.subr.mxu0 0.0
    %96 = vmatpush2.msra.mxu0 0.0
    %97 = vmatprep.subr.mxu0 0.0
    %98 = vmatpush2.msra.mxu0 0.0
    %99 = vmatprep.subr.mxu0 0.0
    %100 = vmatpush2.msra.mxu0 0.0
    %101 = vmatprep.subr.mxu0 0.0
    %102 = vmatpush2.msra.mxu0 0.0
    %103 = vmatprep.subr.mxu0 0.0
    %104 = vmatpush2.msra.mxu0 0.0
    %105 = vmatprep.subr.mxu0 0.0
    %106 = vmatpush2.msra.mxu0 0.0
    %107 = vmatprep.mubr.f32.mxu0 0.0
    %108 = vmatmul.mubr.f32.gmra.mxu0 %v41
    %v109 = vpop.f32.mrf.mxu0
    %v110 = vadd.f32 %v37, %v109
    %v111 = vpop.f32.mrf.mxu0
    %112 = vdwg.mxu0
    %v113 = vmax.f32 %v110, 0.0
    %v114 = vld [vmem:[%s3] sm:$0xff]
    %v115 = vld [vmem:[%s3 + $0x8] sm:$0xff]
    %v116 = vld [vmem:[%s3 + $0x10] sm:$0xff]
    %v117 = vld [vmem:[%s3 + $0x18] sm:$0xff]
    %v118 = vld [vmem:[%s3 + $0x20] sm:$0xff]
    %v119 = vld [vmem:[%s3 + $0x28] sm:$0xff]
    %v120 = vld [vmem:[%s3 + $0x30] sm:$0xff]
    %v121 = vld [vmem:[%s3 + $0x38] sm:$0xff]
    %v122 = vld [vmem:[%s4] sm:$0x1]
    %v124 = vlaneseq
    %v125 = vshrl.u32 %v124, 7
    %v126 = vsub.s32 0, %v125
    %v127 = vrot.slane %v122, %v126
    %vm129 = vcmask 523264
    %v131 = vsel %vm129, %v113, 0
    %133 = vmatprep.subr.mxu0 0.0
    %134 = vmatpush1.msra.mxu0 0.0
    %135 = vmatprep.subr.mxu0 0.0
    %136 = vmatpush1.msra.mxu0 0.0
    %137 = vmatprep.subr.mxu0 0.0
    %138 = vmatpush1.msra.mxu0 0.0
    %139 = vmatprep.subr.mxu0 0.0
    %140 = vmatpush1.msra.mxu0 0.0
    %141 = vmatprep.subr.mxu0 0.0
    %142 = vmatpush1.msra.mxu0 0.0
    %143 = vmatprep.subr.mxu0 0.0
    %144 = vmatpush1.msra.mxu0 0.0
    %145 = vmatprep.subr.mxu0 0.0
    %146 = vmatpush1.msra.mxu0 0.0
    %147 = vmatprep.subr.mxu0 0.0
    %148 = vmatpush1.msra.mxu0 0.0
    %149 = vmatprep.subr.mxu0 0.0
    %150 = vmatpush1.msra.mxu0 %v121
    %151 = vmatprep.subr.mxu0 0.0
    %152 = vmatpush1.msra.mxu0 %v120
    %153 = vmatprep.subr.mxu0 0.0
    %154 = vmatpush1.msra.mxu0 %v119
    %155 = vmatprep.subr.mxu0 0.0
    %156 = vmatpush1.msra.mxu0 %v118
    %157 = vmatprep.subr.mxu0 0.0
    %158 = vmatpush1.msra.mxu0 %v117
    %159 = vmatprep.subr.mxu0 0.0
    %160 = vmatpush1.msra.mxu0 %v116
    %161 = vmatprep.subr.mxu0 0.0
    %162 = vmatpush1.msra.mxu0 %v115
    %163 = vmatprep.subr.mxu0 0.0
    %164 = vmatpush1.msra.mxu0 %v114
    %165 = vmatprep.subr.mxu0 0.0
    %166 = vmatpush2.msra.mxu0 0.0
    %167 = vmatprep.subr.mxu0 0.0
    %168 = vmatpush2.msra.mxu0 0.0
    %169 = vmatprep.subr.mxu0 0.0
    %170 = vmatpush2.msra.mxu0 0.0
    %171 = vmatprep.subr.mxu0 0.0
    %172 = vmatpush2.msra.mxu0 0.0
    %173 = vmatprep.subr.mxu0 0.0
    %174 = vmatpush2.msra.mxu0 0.0
    %175 = vmatprep.subr.mxu0 0.0
    %176 = vmatpush2.msra.mxu0 0.0
    %177 = vmatprep.subr.mxu0 0.0
    %178 = vmatpush2.msra.mxu0 0.0
    %179 = vmatprep.subr.mxu0 0.0
    %180 = vmatpush2.msra.mxu0 0.0
    %181 = vmatprep.subr.mxu0 0.0
    %182 = vmatpush2.msra.mxu0 0.0
    %183 = vmatprep.subr.mxu0 0.0
    %184 = vmatpush2.msra.mxu0 0.0
    %185 = vmatprep.subr.mxu0 0.0
    %186 = vmatpush2.msra.mxu0 0.0
    %187 = vmatprep.subr.mxu0 0.0
    %188 = vmatpush2.msra.mxu0 0.0
    %189 = vmatprep.subr.mxu0 0.0
    %190 = vmatpush2.msra.mxu0 0.0
    %191 = vmatprep.subr.mxu0 0.0
    %192 = vmatpush2.msra.mxu0 0.0
    %193 = vmatprep.subr.mxu0 0.0
    %194 = vmatpush2.msra.mxu0 0.0
    %195 = vmatprep.subr.mxu0 0.0
    %196 = vmatpush2.msra.mxu0 0.0
    %197 = vmatprep.mubr.f32.mxu0 0.0
    %198 = vmatmul.mubr.f32.gmra.mxu0 %v131
    %v199 = vpop.f32.mrf.mxu0
    %v200 = vadd.f32 %v127, %v199
    %v201 = vpop.f32.mrf.mxu0
    %202 = vdwg.mxu0
    %v203 = vmax.f32 %v200, 0.0
    %v204 = vld [vmem:[%s5] sm:$0xff]
    %v205 = vld [vmem:[%s5 + $0x8] sm:$0xff]
    %v206 = vld [vmem:[%s5 + $0x10] sm:$0xff]
    %v207 = vld [vmem:[%s5 + $0x18] sm:$0xff]
    %v208 = vld [vmem:[%s5 + $0x20] sm:$0xff]
    %v209 = vld [vmem:[%s5 + $0x28] sm:$0xff]
    %v210 = vld [vmem:[%s6] sm:$0x1]
    %v212 = vlaneseq
    %v213 = vshrl.u32 %v212, 7
    %v214 = vsub.s32 0, %v213
    %v215 = vrot.slane %v210, %v214
    %vm217 = vcmask 392192
    %v219 = vsel %vm217, %v203, 0
    %221 = vmatprep.subr.mxu0 0.0
    %222 = vmatpush1.msra.mxu0 0.0
    %223 = vmatprep.subr.mxu0 0.0
    %224 = vmatpush1.msra.mxu0 0.0
    %225 = vmatprep.subr.mxu0 0.0
    %226 = vmatpush1.msra.mxu0 0.0
    %227 = vmatprep.subr.mxu0 0.0
    %228 = vmatpush1.msra.mxu0 0.0
    %229 = vmatprep.subr.mxu0 0.0
    %230 = vmatpush1.msra.mxu0 0.0
    %231 = vmatprep.subr.mxu0 0.0
    %232 = vmatpush1.msra.mxu0 0.0
    %233 = vmatprep.subr.mxu0 0.0
    %234 = vmatpush1.msra.mxu0 0.0
    %235 = vmatprep.subr.mxu0 0.0
    %236 = vmatpush1.msra.mxu0 0.0
    %237 = vmatprep.subr.mxu0 0.0
    %238 = vmatpush1.msra.mxu0 0.0
    %239 = vmatprep.subr.mxu0 0.0
    %240 = vmatpush1.msra.mxu0 0.0
    %241 = vmatprep.subr.mxu0 0.0
    %242 = vmatpush1.msra.mxu0 %v209
    %243 = vmatprep.subr.mxu0 0.0
    %244 = vmatpush1.msra.mxu0 %v208
    %245 = vmatprep.subr.mxu0 0.0
    %246 = vmatpush1.msra.mxu0 %v207
    %247 = vmatprep.subr.mxu0 0.0
    %248 = vmatpush1.msra.mxu0 %v206
    %249 = vmatprep.subr.mxu0 0.0
    %250 = vmatpush1.msra.mxu0 %v205
    %251 = vmatprep.subr.mxu0 0.0
    %252 = vmatpush1.msra.mxu0 %v204
    %253 = vmatprep.subr.mxu0 0.0
    %254 = vmatpush2.msra.mxu0 0.0
    %255 = vmatprep.subr.mxu0 0.0
    %256 = vmatpush2.msra.mxu0 0.0
    %257 = vmatprep.subr.mxu0 0.0
    %258 = vmatpush2.msra.mxu0 0.0
    %259 = vmatprep.subr.mxu0 0.0
    %260 = vmatpush2.msra.mxu0 0.0
    %261 = vmatprep.subr.mxu0 0.0
    %262 = vmatpush2.msra.mxu0 0.0
    %263 = vmatprep.subr.mxu0 0.0
    %264 = vmatpush2.msra.mxu0 0.0
    %265 = vmatprep.subr.mxu0 0.0
    %266 = vmatpush2.msra.mxu0 0.0
    %267 = vmatprep.subr.mxu0 0.0
    %268 = vmatpush2.msra.mxu0 0.0
    %269 = vmatprep.subr.mxu0 0.0
    %270 = vmatpush2.msra.mxu0 0.0
    %271 = vmatprep.subr.mxu0 0.0
    %272 = vmatpush2.msra.mxu0 0.0
    %273 = vmatprep.subr.mxu0 0.0
    %274 = vmatpush2.msra.mxu0 0.0
    %275 = vmatprep.subr.mxu0 0.0
    %276 = vmatpush2.msra.mxu0 0.0
    %277 = vmatprep.subr.mxu0 0.0
    %278 = vmatpush2.msra.mxu0 0.0
    %279 = vmatprep.subr.mxu0 0.0
    %280 = vmatpush2.msra.mxu0 0.0
    %281 = vmatprep.subr.mxu0 0.0
    %282 = vmatpush2.msra.mxu0 0.0
    %283 = vmatprep.subr.mxu0 0.0
    %284 = vmatpush2.msra.mxu0 0.0
    %285 = vmatprep.mubr.f32.mxu0 0.0
    %286 = vmatmul.mubr.f32.gmra.mxu0 %v219
    %v287 = vpop.f32.mrf.mxu0
    %v288 = vadd.f32 %v215, %v287
    %v289 = vpop.f32.mrf.mxu0
    %290 = vdwg.mxu0
    %vm291 = vcmask 130048
    %292 = vst.msk [vmem:[#allocation2] sm:$0xff] %vm291, %v288
    // Predicated region
    $region30: #{tpu_custom_call.1} parent=1 // pred_check
      _
    $region31: #{tpu_custom_call.1} parent=1 // pred_check_branch
      %294 = sbr.rel (0) target = $region33
    $region32: #{tpu_custom_call.1} parent=1 // pred_region
      %s296 = ssub.s32 128, 128
      %297 = vsyncadd [#allocation3], %s296
      %s299 = sshll.u32 [#allocation2], 4
      %s300 = int_to_ptr.vmem [resolvable:$true] %s299
      %302 = dma.vmem_to_hbm [thread:$0]  %s300, 128, %s7, [#allocation3]
    $region33: #{tpu_custom_call.1} parent=1 // pred_fallthru
      _
    // Predicated region
    $region34: #{tpu_custom_call.1} parent=1 // pred_check
      _
    $region35: #{tpu_custom_call.1} parent=1 // pred_check_branch
      %304 = sbr.rel (0) target = $region37
    $region36: #{tpu_custom_call.1} parent=1 // pred_region
      %305 = dma.done [#allocation3], 128
    $region37: #{tpu_custom_call.1} parent=1 // pred_fallthru
      _
    %306 = vsyncpa [#allocation3], 1

</llo_original>
